<compile_context>
chip_gen: v7x
topology: tpu7x:2x2x1
jax: 0.10.0
libtpu: 0.0.40
codegen_flags: <defaults>
</compile_context>

<pallas_src>
import functools

import jax
import jax.numpy as jnp
from jax.experimental import pallas as pl
from jax.experimental.pallas import tpu as pltpu

_LANE_COLS = 512        # lane-dense last dim (multiple of 128)
_SUBLANE = 8            # second-to-last dim granularity
_MAX_TILE_ROWS = 1024   # 1024 x 512 f32 = 2 MiB per tile buffer


def _round_up(a: int, b: int) -> int:
    return (a + b - 1) // b * b


def _relu6_kernel(x_ref, o_ref):
    # Elementwise on the VPU: relu6(x) = min(max(x, 0), 6).
    # Scalar constants lower to vector-immediate compares (no broadcast vregs).
    x = x_ref[...]
    o_ref[...] = jnp.minimum(jnp.maximum(x, 0.0), 6.0)


@functools.partial(jax.jit, static_argnames=())
def relu6_pallas(x: jax.Array) -> jax.Array:
    orig_shape = x.shape
    orig_dtype = x.dtype
    n = x.size
    if n == 0:
        return x

    # Flatten + pad to a lane-dense (rows, 512) slab.
    rows_needed = _round_up(pl.cdiv(n, _LANE_COLS), _SUBLANE)
    tile_rows = min(rows_needed, _MAX_TILE_ROWS)
    rows = _round_up(rows_needed, tile_rows)

    flat = jnp.ravel(x)
    flat = jnp.pad(flat, (0, rows * _LANE_COLS - n))
    x2d = flat.reshape(rows, _LANE_COLS)

    grid = (rows // tile_rows,)

    out2d = pl.pallas_call(
        _relu6_kernel,
        out_shape=jax.ShapeDtypeStruct((rows, _LANE_COLS), orig_dtype),
        grid_spec=pl.GridSpec(
            grid=grid,
            in_specs=[pl.BlockSpec((tile_rows, _LANE_COLS), lambda i: (i, 0))],
            out_specs=pl.BlockSpec((tile_rows, _LANE_COLS), lambda i: (i, 0)),
        ),
        compiler_params=pltpu.CompilerParams(
            dimension_semantics=("parallel",)),
        # The slab is a temporary created in this wrapper; reuse its buffer.
        input_output_aliases={0: 0},
    )(x2d)

    return out2d.reshape(-1)[:n].reshape(orig_shape)


if __name__ == "__main__":
    key = jax.random.PRNGKey(0)

    # Matches the module-level example input: x = torch.randn(1, 6)
    k1, k2 = jax.random.split(key)
    x_small = jax.random.normal(k1, (1, 6), dtype=jnp.float32) * 4.0

    out_small = relu6_pallas(x_small)
    jax.block_until_ready(out_small)
    ref_small = jnp.clip(x_small, 0.0, 6.0)
    assert out_small.shape == x_small.shape and out_small.dtype == x_small.dtype
    assert jnp.allclose(out_small, ref_small), (out_small, ref_small)

    # Exercise the multi-tile lane-dense path on a larger elementwise input.
    x_big = jax.random.normal(k2, (1024, 2048), dtype=jnp.float32) * 4.0
    out_big = relu6_pallas(x_big)
    jax.block_until_ready(out_big)
    ref_big = jnp.clip(x_big, 0.0, 6.0)
    assert out_big.shape == x_big.shape and out_big.dtype == x_big.dtype
    assert jnp.allclose(out_big, ref_big)

    print("KERNEL_OK")
</pallas_src>

<mosaic_0001>
module attributes {stable_mosaic.version = 11 : i64} {
  func.func @_relu6_kernel(%arg0: i32, %arg1: memref<8x512xf32, #tpu.memory_space<vmem>>, %arg2: memref<8x512xf32, #tpu.memory_space<vmem>>) attributes {dimension_semantics = [#tpu.dimension_semantics<parallel>], iteration_bounds = array<i64: 1>, scalar_prefetch = 0 : i64, scratch_operands = 0 : i64, tpu.core_type = #tpu.core_type<tc>, window_params = [{transform_indices = @transform_0, window_bounds = array<i64: 8, 512>}, {transform_indices = @transform_1, window_bounds = array<i64: 8, 512>}]} {
    %c0 = arith.constant 0 : index
    %c0_0 = arith.constant 0 : index
    %0 = vector.load %arg1[%c0, %c0_0] : memref<8x512xf32, #tpu.memory_space<vmem>>, vector<8x512xf32>
    %cst = arith.constant 0.000000e+00 : f32
    %1 = vector.broadcast %cst : f32 to vector<8x512xf32>
    %2 = arith.maximumf %0, %1 : vector<8x512xf32>
    %cst_1 = arith.constant 6.000000e+00 : f32
    %3 = vector.broadcast %cst_1 : f32 to vector<8x512xf32>
    %4 = arith.minimumf %2, %3 : vector<8x512xf32>
    %c0_2 = arith.constant 0 : index
    %c0_3 = arith.constant 0 : index
    %5 = vector.load %arg2[%c0_2, %c0_3] : memref<8x512xf32, #tpu.memory_space<vmem>>, vector<8x512xf32>
    tpu.vector_store %arg2[%c0_2, %c0_3], %4 {strides = array<i32>} : memref<8x512xf32, #tpu.memory_space<vmem>>, vector<8x512xf32>,
    return
  }
  func.func @transform_0(%arg0: i32) -> (i32, i32) {
    %c0_i32 = arith.constant 0 : i32
    %c0_i32_0 = arith.constant 0 : i32
    return %arg0, %c0_i32 : i32, i32
  }
  func.func @transform_1(%arg0: i32) -> (i32, i32) {
    %c0_i32 = arith.constant 0 : i32
    %c0_i32_0 = arith.constant 0 : i32
    return %arg0, %c0_i32 : i32, i32
  }
}

</mosaic_0001>

<llo_original>
// kernel: relu6_pallas.1
$region0: #{relu6_pallas.1}
  #allocation0 [shape = 'u32[]', space=smem, size = 0x4, offset = 0x4, fixed_abs, tag = 'smem constant byte address 0x4 - core index']
  #allocation1 [shape = 'u32[144,128]{1,0:T(1,128)}', space=vmem, size = 0x12000, scoped, tag = 'internal scratch']
  %s0 = inlined_call_operand.vmem [shape: f32[8,512], index: 0, kind: input, shape index: {}, may-alias: {0,1}]
  %s1 = inlined_call_operand.vmem [shape: f32[8,512], index: 1, kind: output, shape index: {}, may-alias: {0,1}]
  %s2 = sld [smem:[#allocation0]]
  $region14: #{relu6_pallas.1} parent=0
    _
  %s4 = ssub.s32 1, %s2
  %s5 = scalar_select 0, %s4, %s2
  // Predicated region
  $region2: #{relu6_pallas.1} parent=0 // pred_check
    _
  $region3: #{relu6_pallas.1} parent=0 // pred_check_branch
    %7 = sbr.rel (0) target = $region5
  $region4: #{relu6_pallas.1} parent=0 // pred_region
    _
  $region5: #{relu6_pallas.1} parent=0 // pred_fallthru
    _
  %v8 = vld [vmem:[%s0] sm:$0xff]
  %v9 = vld [vmem:[%s0 + $0x8] sm:$0xff]
  %v10 = vld [vmem:[%s0 + $0x10] sm:$0xff]
  %v11 = vld [vmem:[%s0 + $0x18] sm:$0xff]
  %v12 = vmax.f32 %v8, 0.0
  %v13 = vmax.f32 %v9, 0.0
  %v14 = vmax.f32 %v10, 0.0
  %v15 = vmax.f32 %v11, 0.0
  %v16 = vmin.f32 %v12, 6.0
  %v17 = vmin.f32 %v13, 6.0
  %v18 = vmin.f32 %v14, 6.0
  %v19 = vmin.f32 %v15, 6.0
  %20 = vst [vmem:[%s1] sm:$0xff] %v16
  %21 = vst [vmem:[%s1 + $0x8] sm:$0xff] %v17
  %22 = vst [vmem:[%s1 + $0x10] sm:$0xff] %v18
  %23 = vst [vmem:[%s1 + $0x18] sm:$0xff] %v19
  // Predicated region
  $region6: #{relu6_pallas.1} parent=0 // pred_check
    _
  $region7: #{relu6_pallas.1} parent=0 // pred_check_branch
    %25 = sbr.rel (0) target = $region9
  $region8: #{relu6_pallas.1} parent=0 // pred_region
    _
  $region9: #{relu6_pallas.1} parent=0 // pred_fallthru
    _
  // Predicated region
  $region10: #{relu6_pallas.1} parent=0 // pred_check
    _
  $region11: #{relu6_pallas.1} parent=0 // pred_check_branch
    %27 = sbr.rel (0) target = $region13
  $region12: #{relu6_pallas.1} parent=0 // pred_region
    _
  $region13: #{relu6_pallas.1} parent=0 // pred_fallthru
    _

</llo_original>
